<compile_context>
chip_gen: v7x
topology: tpu7x:2x2x1
jax: 0.10.0
libtpu: 0.0.40
codegen_flags: <defaults>
</compile_context>

<pallas_src>
import functools

import jax
import jax.numpy as jnp
from jax.experimental import pallas as pl
from jax.experimental.pallas import tpu as pltpu

_LANE = 128          # lane width / j-chunk size
_TILE_I = 128        # output rows (i) per grid step (sublane axis of the tile)
_PAD_VALUE = -1e30   # tanh(0.5*(pad - s)) == -1 exactly -> padded j contributes 0


def _smooth_rank_kernel(col_ref, row_ref, out_ref, *, n_chunks, offset):
    # col_ref : (TILE_I, 1)       scores s_i for this output tile (sublane axis)
    # row_ref : (n_chunks, 128)   all scores s_j of this query, 128 per chunk (lanes)
    # out_ref : (TILE_I, 1) f32   smooth ranks for this output tile
    half_i = col_ref[...] * 0.5                                  # (TILE_I, 1)
    # Hoisted lane-broadcast (JAX does not CSE broadcast_in_dim inside loops).
    half_i_b = jnp.broadcast_to(half_i, (_TILE_I, _LANE))        # (TILE_I, 128)

    def body(c, acc):
        half_j = row_ref[pl.ds(c, 1), :] * 0.5                   # (1, 128)
        # sigmoid(s_j - s_i) = 0.5 + 0.5*tanh(0.5*(s_j - s_i)); only the tanh
        # sum is accumulated here (1 EUP op / element), offsets applied below.
        t = jnp.tanh(half_j - half_i_b)                          # (TILE_I, 128)
        return acc + t.astype(jnp.float32)                       # f32 accumulate (VPU)

    unroll = 1
    for u in (8, 4, 2):
        if n_chunks % u == 0:
            unroll = u
            break
    acc = jax.lax.fori_loop(
        0, n_chunks, body,
        jnp.zeros((_TILE_I, _LANE), jnp.float32),
        unroll=unroll)

    # Single cross-lane (XLU) reduction per output tile, off the hot loop.
    ranks = 0.5 * jnp.sum(acc, axis=1, keepdims=True) + offset   # (TILE_I, 1) f32
    out_ref[...] = ranks.astype(out_ref.dtype)


def _round_up(x, m):
    return ((x + m - 1) // m) * m


def _default_compute_dtype():
    # bf16 hot path only on chips with bf16-native VPU/EUP (v6e / v7x);
    # on v5e and older it would only add pack/unpack work with no EUP gain.
    try:
        kind = jax.devices()[0].device_kind.lower()
    except Exception:
        return jnp.float32
    if "v6" in kind or "v7" in kind:
        return jnp.bfloat16
    return jnp.float32


@functools.partial(jax.jit, static_argnames=("compute_dtype",))
def _smooth_rank_impl(scores, *, compute_dtype):
    B, N = scores.shape
    n_pad = _round_up(max(N, 1), _LANE)
    n_chunks = n_pad // _LANE
    n_i = n_pad // _TILE_I

    # Pad the candidate axis to a lane multiple with a large negative sentinel
    # (padded columns then contribute exactly 0 to every rank).  The cast to
    # the compute dtype fuses into this op - no separate f32 round trip.
    padded = jnp.pad(scores, ((0, 0), (0, n_pad - N)),
                     constant_values=_PAD_VALUE).astype(compute_dtype)

    scores_col = padded[:, :, None]                   # (B, n_pad, 1): i tiles (sublanes)
    scores_row = padded.reshape(B, n_chunks, _LANE)   # (B, n_chunks, 128): j chunks (lanes)

    # ranks_i = sum_j sigmoid(s_j - s_i) + 0.5
    #         = 0.5 * sum_j tanh(0.5*(s_j - s_i)) + 0.5 * (n_pad + 1)
    offset = 0.5 * (n_pad + 1)

    kernel = functools.partial(_smooth_rank_kernel,
                               n_chunks=n_chunks, offset=offset)

    out3 = pl.pallas_call(
        kernel,
        out_shape=jax.ShapeDtypeStruct((B, n_pad, 1), jnp.float32),
        grid_spec=pltpu.PrefetchScalarGridSpec(
            num_scalar_prefetch=0,
            grid=(B, n_i),
            in_specs=[
                pl.BlockSpec((None, _TILE_I, 1), lambda b, i: (b, i, 0)),
                pl.BlockSpec((None, n_chunks, _LANE), lambda b, i: (b, 0, 0)),
            ],
            out_specs=pl.BlockSpec((None, _TILE_I, 1), lambda b, i: (b, i, 0)),
        ),
        compiler_params=pltpu.CompilerParams(
            dimension_semantics=("parallel", "parallel"),
            vmem_limit_bytes=32 * 1024 * 1024,
        ),
        cost_estimate=pl.CostEstimate(
            flops=3 * B * n_pad * n_pad,
            transcendentals=B * n_pad * n_pad,
            bytes_accessed=2 * B * n_pad * jnp.dtype(compute_dtype).itemsize
                           + B * n_pad * 4,
        ),
    )(scores_col, scores_row)

    return out3[:, :N, 0]


def smooth_rank(scores, compute_dtype=None):
    """Pallas equivalent of SmoothRank.forward.  scores: [..., N] float."""
    if compute_dtype is None:
        compute_dtype = _default_compute_dtype()
    orig_shape = scores.shape
    flat = scores.reshape(-1, orig_shape[-1])
    ranks = _smooth_rank_impl(flat, compute_dtype=jnp.dtype(compute_dtype))
    return ranks.reshape(orig_shape).astype(scores.dtype)


def _reference(scores):
    """Pure-JAX float32 reference mirroring the PyTorch module exactly."""
    x_0 = scores[..., :, None]
    x_1 = scores[..., None, :]
    diff = x_1 - x_0
    is_lower = jax.nn.sigmoid(diff)
    return jnp.sum(is_lower, axis=-1) + 0.5


if __name__ == "__main__":
    key = jax.random.PRNGKey(0)

    # A ranking batch: 2 queries x 200 candidate documents (pads 200 -> 256).
    B, N = 2, 200
    scores = jax.random.normal(key, (B, N), dtype=jnp.float32)
    ref = _reference(scores)

    # 1) float32 hot path: tight check against the PyTorch-equivalent reference.
    ranks_f32 = jax.block_until_ready(smooth_rank(scores, compute_dtype=jnp.float32))
    assert ranks_f32.shape == (B, N)
    err_f32 = float(jnp.max(jnp.abs(ranks_f32 - ref)))
    assert err_f32 < 2e-3, f"f32 path max abs err {err_f32}"

    # 2) Chip-default path (bf16 hot path on v6e/v7x, f32 elsewhere).  bf16
    #    rounding of the O(N^2) pairwise terms accumulates, hence the looser bound.
    ranks_auto = jax.block_until_ready(smooth_rank(scores))
    auto_is_f32 = jnp.dtype(_default_compute_dtype()) == jnp.dtype(jnp.float32)
    tol = 2e-3 if auto_is_f32 else 2.0
    err_auto = float(jnp.max(jnp.abs(ranks_auto - ref)))
    assert err_auto < tol, f"auto path max abs err {err_auto}"

    # 3) Tiny, heavily padded case (37 -> 128 candidates) exercising the pad path.
    scores2 = jax.random.normal(jax.random.PRNGKey(1), (3, 37), dtype=jnp.float32)
    ranks2 = jax.block_until_ready(smooth_rank(scores2, compute_dtype=jnp.float32))
    err2 = float(jnp.max(jnp.abs(ranks2 - _reference(scores2))))
    assert err2 < 1e-3, f"padded case max abs err {err2}"

    print("KERNEL_OK")
</pallas_src>

<mosaic_0001>
module attributes {stable_mosaic.version = 11 : i64} {
  func.func @_smooth_rank_kernel(%arg0: i32, %arg1: i32, %arg2: memref<1x128x1xf32, #tpu.memory_space<vmem>>, %arg3: memref<1x2x128xf32, #tpu.memory_space<vmem>>, %arg4: memref<1x128x1xf32, #tpu.memory_space<vmem>>) attributes {dimension_semantics = [#tpu.dimension_semantics<parallel>, #tpu.dimension_semantics<parallel>], iteration_bounds = array<i64: 2, 2>, scalar_prefetch = 0 : i64, scratch_operands = 0 : i64, tpu.core_type = #tpu.core_type<tc>, window_params = [{transform_indices = @transform_0, window_bounds = array<i64: 1, 128, 1>}, {transform_indices = @transform_1, window_bounds = array<i64: 1, 2, 128>}, {transform_indices = @transform_2, window_bounds = array<i64: 1, 128, 1>}]} {
    %c0 = arith.constant 0 : index
    %c0_0 = arith.constant 0 : index
    %c0_1 = arith.constant 0 : index
    %0 = vector.load %arg2[%c0, %c0_0, %c0_1] : memref<1x128x1xf32, #tpu.memory_space<vmem>>, vector<1x128x1xf32>
    %1 = vector.shape_cast %0 : vector<1x128x1xf32> to vector<128x1xf32>
    %cst = arith.constant 5.000000e-01 : f32
    %2 = vector.broadcast %cst : f32 to vector<128x1xf32>
    %3 = arith.mulf %1, %2 : vector<128x1xf32>
    %4 = vector.shape_cast %3 : vector<128x1xf32> to vector<128x1xf32>
    %5 = vector.broadcast %4 : vector<128x1xf32> to vector<128x128xf32>
    %cst_2 = arith.constant 0.000000e+00 : f32
    %6 = vector.broadcast %cst_2 : f32 to vector<128x128xf32>
    %c0_i32 = arith.constant 0 : i32
    %c0_3 = arith.constant 0 : index
    %7 = arith.index_cast %c0_i32 : i32 to index
    %c0_4 = arith.constant 0 : index
    %8 = vector.load %arg3[%c0_3, %7, %c0_4] : memref<1x2x128xf32, #tpu.memory_space<vmem>>, vector<1x1x128xf32>
    %9 = vector.shape_cast %8 : vector<1x1x128xf32> to vector<1x128xf32>
    %cst_5 = arith.constant 5.000000e-01 : f32
    %10 = vector.broadcast %cst_5 : f32 to vector<1x128xf32>
    %11 = arith.mulf %9, %10 : vector<1x128xf32>
    %12 = vector.broadcast %11 : vector<1x128xf32> to vector<128x128xf32>
    %13 = arith.subf %12, %5 : vector<128x128xf32>
    %14 = math.tanh %13 : vector<128x128xf32>
    %15 = arith.addf %6, %14 : vector<128x128xf32>
    %c1_i32 = arith.constant 1 : i32
    %c0_6 = arith.constant 0 : index
    %16 = arith.index_cast %c1_i32 : i32 to index
    %c0_7 = arith.constant 0 : index
    %17 = vector.load %arg3[%c0_6, %16, %c0_7] : memref<1x2x128xf32, #tpu.memory_space<vmem>>, vector<1x1x128xf32>
    %18 = vector.shape_cast %17 : vector<1x1x128xf32> to vector<1x128xf32>
    %cst_8 = arith.constant 5.000000e-01 : f32
    %19 = vector.broadcast %cst_8 : f32 to vector<1x128xf32>
    %20 = arith.mulf %18, %19 : vector<1x128xf32>
    %21 = vector.broadcast %20 : vector<1x128xf32> to vector<128x128xf32>
    %22 = arith.subf %21, %5 : vector<128x128xf32>
    %23 = math.tanh %22 : vector<128x128xf32>
    %24 = arith.addf %15, %23 : vector<128x128xf32>
    %c2_i32 = arith.constant 2 : i32
    %cst_9 = arith.constant dense<0.000000e+00> : vector<128xf32>
    %25 = vector.multi_reduction <add>, %24, %cst_9 [1] : vector<128x128xf32> to vector<128xf32>
    %26 = vector.shape_cast %25 : vector<128xf32> to vector<128x1xf32>
    %cst_10 = arith.constant 5.000000e-01 : f32
    %27 = vector.broadcast %cst_10 : f32 to vector<128x1xf32>
    %28 = arith.mulf %27, %26 : vector<128x1xf32>
    %cst_11 = arith.constant 1.285000e+02 : f32
    %29 = vector.broadcast %cst_11 : f32 to vector<128x1xf32>
    %30 = arith.addf %28, %29 : vector<128x1xf32>
    %c0_12 = arith.constant 0 : index
    %c0_13 = arith.constant 0 : index
    %c0_14 = arith.constant 0 : index
    %31 = vector.load %arg4[%c0_12, %c0_13, %c0_14] : memref<1x128x1xf32, #tpu.memory_space<vmem>>, vector<1x128x1xf32>
    %32 = vector.shape_cast %31 : vector<1x128x1xf32> to vector<128x1xf32>
    %33 = vector.shape_cast %30 : vector<128x1xf32> to vector<1x128x1xf32>
    tpu.vector_store %arg4[%c0_12, %c0_13, %c0_14], %33 {strides = array<i32>} : memref<1x128x1xf32, #tpu.memory_space<vmem>>, vector<1x128x1xf32>,
    return
  }
  func.func @transform_0(%arg0: i32, %arg1: i32) -> (i32, i32, i32) {
    %c0_i32 = arith.constant 0 : i32
    %c0_i32_0 = arith.constant 0 : i32
    return %arg0, %arg1, %c0_i32 : i32, i32, i32
  }
  func.func @transform_1(%arg0: i32, %arg1: i32) -> (i32, i32, i32) {
    %c0_i32 = arith.constant 0 : i32
    %c0_i32_0 = arith.constant 0 : i32
    %c0_i32_1 = arith.constant 0 : i32
    return %arg0, %c0_i32, %c0_i32_0 : i32, i32, i32
  }
  func.func @transform_2(%arg0: i32, %arg1: i32) -> (i32, i32, i32) {
    %c0_i32 = arith.constant 0 : i32
    %c0_i32_0 = arith.constant 0 : i32
    return %arg0, %arg1, %c0_i32 : i32, i32, i32
  }
}

</mosaic_0001>

<llo_original>
// kernel: _smooth_rank_impl.1
$region0: #{_smooth_rank_impl.1}
  #allocation0 [shape = 'u32[]', space=smem, size = 0x4, offset = 0x4, fixed_abs, tag = 'smem constant byte address 0x4 - core index']
  #allocation1 [shape = 'u32[144,128]{1,0:T(1,128)}', space=vmem, size = 0x12000, scoped, tag = 'internal scratch']
  %s0 = inlined_call_operand.vmem [shape: f32[2,256,1], index: 0, kind: input, shape index: {}]
  %s1 = inlined_call_operand.vmem [shape: f32[2,2,128], index: 1, kind: input, shape index: {}]
  %s2 = inlined_call_operand.vmem [shape: f32[2,256,1], index: 2, kind: output, shape index: {}]
  %s3 = sld [smem:[#allocation0]]
  $region41: #{_smooth_rank_impl.1} parent=0
    _
  %s5 = ssub.s32 1, %s3
  %s6 = scalar_select 0, %s5, %s3
  loop: start=0, step=1, limit=6
  $region2: #{_smooth_rank_impl.1} parent=0 // loop_pre_header
    _
  $region3: #{_smooth_rank_impl.1} parent=0 // loop_header
    %s8 = sphi 0, %s12
    %p9 = scmp.ge.s32.totalorder %s8, 6
    %s15 = sphi 0, %s27
    %s16 = sphi 0, %s23
    %s17 = sphi 0, %s15
    %s18 = sphi 0, %s16
    %s19 = sphi 0, %s17
    %s20 = sphi 0, %s18
    %s32 = sphi 0, %s34
    %s35 = sphi 0, %s32
    %s36 = sphi 0, %s35
    %s52 = sphi 0, %s36
    %s58 = sphi 0, %s60
    %s61 = sphi 0, %s58
    %s62 = sphi 0, %s61
    %s78 = sphi 0, %s62
    %s86 = sphi 0, %s88
    %s89 = sphi 0, %s86
    %s90 = sphi 0, %s89
    %s106 = sphi 0, %s90
  $region4: #{_smooth_rank_impl.1} parent=0 // loop_header_branch
    %11 = sbr.rel (%p9) target = $region8
  $region5: #{_smooth_rank_impl.1} parent=0 // loop_body
    %s13 = ssub.s32 %s8, 1
    %s14 = ssub.s32 %s8, 2
    %s21 = sadd.s32 1, %s16
    %p22 = scmp.ge.s32.totalorder %s21, 2
    %s23 = scalar_select %p22, 0, %s21
    %s24 = sadd.s32 1, %s15
    %s25 = scalar_select %p22, %s24, %s15
    %p26 = scmp.ge.s32.totalorder %s25, 2
    %s27 = scalar_select %p26, 0, %s25
    %s28 = ssub.s32 %s15, %s27
    %s29 = ssub.s32 %s16, %s23
    %s30 = sor.u32 %s28, %s29
    %p31 = scmp.eq.s32.totalorder %s30, 0
    %s33 = sadd.s32 %s32, 1
    %s34 = scalar_select %p31, %s32, %s33
    %p37 = pneg %p31
    %p38 = scmp.eq.s32.totalorder %s8, 3
    %p39 = por %p37, %p38
    %p40 = scmp.ne.s32.totalorder %s32, %s35
    %p41 = scmp.eq.s32.totalorder %s8, 0
    %p42 = por %p40, %p41
    %p43 = scmp.ne.s32.totalorder %s32, %s35
    %p44 = scmp.eq.s32.totalorder %s13, 3
    %p45 = por %p43, %p44
    %p46 = scmp.ne.s32.totalorder %s35, %s36
    %p47 = scmp.eq.s32.totalorder %s13, 0
    %p48 = por %p46, %p47
    %p49 = scmp.ne.s32.totalorder %s35, %s36
    %p50 = scmp.eq.s32.totalorder %s14, 3
    %p51 = por %p49, %p50
    %p53 = scmp.ne.s32.totalorder %s36, %s52
    %p54 = scmp.eq.s32.totalorder %s14, 0
    %p55 = por %p53, %p54
    %s56 = ssub.s32 %s15, %s27
    %p57 = scmp.eq.s32.totalorder %s56, 0
    %s59 = sadd.s32 %s58, 1
    %s60 = scalar_select %p57, %s58, %s59
    %p63 = pneg %p57
    %p64 = scmp.eq.s32.totalorder %s8, 3
    %p65 = por %p63, %p64
    %p66 = scmp.ne.s32.totalorder %s58, %s61
    %p67 = scmp.eq.s32.totalorder %s8, 0
    %p68 = por %p66, %p67
    %p69 = scmp.ne.s32.totalorder %s58, %s61
    %p70 = scmp.eq.s32.totalorder %s13, 3
    %p71 = por %p69, %p70
    %p72 = scmp.ne.s32.totalorder %s61, %s62
    %p73 = scmp.eq.s32.totalorder %s13, 0
    %p74 = por %p72, %p73
    %p75 = scmp.ne.s32.totalorder %s61, %s62
    %p76 = scmp.eq.s32.totalorder %s14, 3
    %p77 = por %p75, %p76
    %p79 = scmp.ne.s32.totalorder %s62, %s78
    %p80 = scmp.eq.s32.totalorder %s14, 0
    %p81 = por %p79, %p80
    %s82 = ssub.s32 %s15, %s27
    %s83 = ssub.s32 %s16, %s23
    %s84 = sor.u32 %s82, %s83
    %p85 = scmp.eq.s32.totalorder %s84, 0
    %s87 = sadd.s32 %s86, 1
    %s88 = scalar_select %p85, %s86, %s87
    %p91 = pneg %p85
    %p92 = scmp.eq.s32.totalorder %s8, 3
    %p93 = por %p91, %p92
    %p94 = scmp.ne.s32.totalorder %s86, %s89
    %p95 = scmp.eq.s32.totalorder %s8, 0
    %p96 = por %p94, %p95
    %p97 = scmp.ne.s32.totalorder %s86, %s89
    %p98 = scmp.eq.s32.totalorder %s13, 3
    %p99 = por %p97, %p98
    %p100 = scmp.ne.s32.totalorder %s89, %s90
    %p101 = scmp.eq.s32.totalorder %s13, 0
    %p102 = por %p100, %p101
    %p103 = scmp.ne.s32.totalorder %s89, %s90
    %p104 = scmp.eq.s32.totalorder %s14, 3
    %p105 = por %p103, %p104
    %p107 = scmp.ne.s32.totalorder %s90, %s106
    %p108 = scmp.eq.s32.totalorder %s14, 0
    %p109 = por %p107, %p108
    %p110 = scmp.le.s32.totalorder 1, %s8
    %p111 = scmp.lt.s32.totalorder %s8, 5
    %p112 = pnand %p110, %p111
    %p113 = pneg %p112
    // Predicated region
    $region9: #{_smooth_rank_impl.1} parent=5 // pred_check
      _
    $region10: #{_smooth_rank_impl.1} parent=5 // pred_check_branch
      %115 = sbr.rel (%p112) target = $region12
    $region11: #{_smooth_rank_impl.1} parent=5 // pred_region
      %s116 = ssub.s32 %s8, 1
    $region12: #{_smooth_rank_impl.1} parent=5 // pred_fallthru
      _
    %p117 = scmp.lt.s32.totalorder %s8, 4
    // Predicated region
    $region13: #{_smooth_rank_impl.1} parent=5 // pred_check
      %p118 = pneg %p117
    $region14: #{_smooth_rank_impl.1} parent=5 // pred_check_branch
      %120 = sbr.rel (%p118) target = $region16
    $region15: #{_smooth_rank_impl.1} parent=5 // pred_region
      // Predicated region
      $region17: #{_smooth_rank_impl.1} parent=15 // pred_check
        %p121 = pneg %p42
      $region18: #{_smooth_rank_impl.1} parent=15 // pred_check_branch
        %123 = sbr.rel (%p121) target = $region20
      $region19: #{_smooth_rank_impl.1} parent=15 // pred_region
        %s124 = smul.u32 16, %s16
        %p125 = scmp.lt.s32.totalorder %s15, 1
        %s126 = scalar_select %p125, %s15, 1
        %p127 = scmp.lt.s32.totalorder %s124, 31
        %s128 = scalar_select %p127, %s124, 31
        %s129 = smul.addr %s126, 32
        %s130 = sadd.s32 %s128, %s129
        %s131 = smul.addr %s130, 8
        %s132 = scalar_lea.vmem %s0, %s131
        %s133 = smul.u32 16, %s16
      $region20: #{_smooth_rank_impl.1} parent=15 // pred_fallthru
        _
      // Predicated region
      $region21: #{_smooth_rank_impl.1} parent=15 // pred_check
        %p134 = pneg %p68
      $region22: #{_smooth_rank_impl.1} parent=15 // pred_check_branch
        %136 = sbr.rel (%p134) target = $region24
      $region23: #{_smooth_rank_impl.1} parent=15 // pred_region
        %p137 = scmp.lt.s32.totalorder %s15, 1
        %s138 = scalar_select %p137, %s15, 1
        %s139 = smul.addr %s138, 2
        %s140 = scalar_lea.vmem %s1, %s139
      $region24: #{_smooth_rank_impl.1} parent=15 // pred_fallthru
        _
    $region16: #{_smooth_rank_impl.1} parent=5 // pred_fallthru
      _
    %p141 = scmp.le.s32.totalorder 1, %s8
    %p142 = scmp.lt.s32.totalorder %s8, 5
    %p143 = pnand %p141, %p142
    %p144 = pneg %p143
    // Predicated region
    $region25: #{_smooth_rank_impl.1} parent=5 // pred_check
      _
    $region26: #{_smooth_rank_impl.1} parent=5 // pred_check_branch
      %146 = sbr.rel (%p143) target = $region28
    $region27: #{_smooth_rank_impl.1} parent=5 // pred_region
      %s147 = ssub.s32 %s8, 1
      %s148 = smul.u32 16, %s18
      %p149 = scmp.lt.s32.totalorder %s17, 1
      %s150 = scalar_select %p149, %s17, 1
      %p151 = scmp.lt.s32.totalorder %s148, 31
      %s152 = scalar_select %p151, %s148, 31
      %s153 = smul.addr %s150, 32
      %s154 = sadd.s32 %s152, %s153
      %s155 = smul.addr %s154, 8
      %s156 = scalar_lea.vmem %s0, %s155
      %p157 = pneg %p48
      %p158 = pneg %p45
      %p159 = scmp.lt.s32.totalorder %s17, 1
      %s160 = scalar_select %p159, %s17, 1
      %s161 = smul.addr %s160, 2
      %s162 = scalar_lea.vmem %s1, %s161
      %p163 = pneg %p74
      %p164 = pneg %p71
      %p165 = pneg %p102
      %p166 = pneg %p99
      %s167 = smul.u32 16, %s18
      %p168 = scmp.lt.s32.totalorder %s17, 1
      %s169 = scalar_select %p168, %s17, 1
      %p170 = scmp.lt.s32.totalorder %s167, 31
      %s171 = scalar_select %p170, %s167, 31
      %s172 = smul.addr %s169, 32
      %s173 = sadd.s32 %s171, %s172
      %s174 = smul.addr %s173, 8
      %s175 = scalar_lea.vmem %s2, %s174
      %s176 = smul.u32 16, %s18
      %p177 = scmp.lt.s32.totalorder %s17, 1
      %s178 = scalar_select %p177, %s17, 1
      %p179 = scmp.lt.s32.totalorder %s176, 31
      %s180 = scalar_select %p179, %s176, 31
      %s181 = smul.addr %s178, 32
      %s182 = sadd.s32 %s180, %s181
      %s183 = smul.addr %s182, 8
      %s184 = scalar_lea.vmem %s0, %s183
      %s185 = smul.u32 16, %s18
      %p186 = scmp.lt.s32.totalorder %s17, 1
      %s187 = scalar_select %p186, %s17, 1
      %s188 = smul.addr %s187, 2
      %s189 = scalar_lea.vmem %s1, %s188
      %s190 = smul.u32 16, %s18
      %p191 = scmp.lt.s32.totalorder %s17, 1
      %s192 = scalar_select %p191, %s17, 1
      %p193 = scmp.lt.s32.totalorder %s190, 31
      %s194 = scalar_select %p193, %s190, 31
      %s195 = smul.addr %s192, 32
      %s196 = sadd.s32 %s194, %s195
      %s197 = smul.addr %s196, 8
      %s198 = scalar_lea.vmem %s2, %s197
      %s199 = smul.u32 16, %s18
      %v200 = vld [vmem:[%s184] sm:$0xff]
      %v201 = vld [vmem:[%s184 + $0x8] sm:$0xff]
      %v202 = vld [vmem:[%s184 + $0x10] sm:$0xff]
      %v203 = vld [vmem:[%s184 + $0x18] sm:$0xff]
      %v204 = vld [vmem:[%s184 + $0x20] sm:$0xff]
      %v205 = vld [vmem:[%s184 + $0x28] sm:$0xff]
      %v206 = vld [vmem:[%s184 + $0x30] sm:$0xff]
      %v207 = vld [vmem:[%s184 + $0x38] sm:$0xff]
      %v208 = vld [vmem:[%s184 + $0x40] sm:$0xff]
      %v209 = vld [vmem:[%s184 + $0x48] sm:$0xff]
      %v210 = vld [vmem:[%s184 + $0x50] sm:$0xff]
      %v211 = vld [vmem:[%s184 + $0x58] sm:$0xff]
      %v212 = vld [vmem:[%s184 + $0x60] sm:$0xff]
      %v213 = vld [vmem:[%s184 + $0x68] sm:$0xff]
      %v214 = vld [vmem:[%s184 + $0x70] sm:$0xff]
      %v215 = vld [vmem:[%s184 + $0x78] sm:$0xff]
      %v216 = vmul.f32 %v200, 0.5
      %v217 = vmul.f32 %v201, 0.5
      %v218 = vmul.f32 %v202, 0.5
      %v219 = vmul.f32 %v203, 0.5
      %v220 = vmul.f32 %v204, 0.5
      %v221 = vmul.f32 %v205, 0.5
      %v222 = vmul.f32 %v206, 0.5
      %v223 = vmul.f32 %v207, 0.5
      %v224 = vmul.f32 %v208, 0.5
      %v225 = vmul.f32 %v209, 0.5
      %v226 = vmul.f32 %v210, 0.5
      %v227 = vmul.f32 %v211, 0.5
      %v228 = vmul.f32 %v212, 0.5
      %v229 = vmul.f32 %v213, 0.5
      %v230 = vmul.f32 %v214, 0.5
      %v231 = vmul.f32 %v215, 0.5
      %233 = vset.pattern.permute.xlu0 0
      %234 = vperm.xlu0 %233, %v216
      %v235 = vpop.permute.xlu0 %234
      %238 = vset.pattern.permute.xlu0 0
      %239 = vperm.xlu0 %238, %v217
      %v240 = vpop.permute.xlu0 %239
      %243 = vset.pattern.permute.xlu0 0
      %244 = vperm.xlu0 %243, %v218
      %v245 = vpop.permute.xlu0 %244
      %248 = vset.pattern.permute.xlu0 0
      %249 = vperm.xlu0 %248, %v219
      %v250 = vpop.permute.xlu0 %249
      %253 = vset.pattern.permute.xlu0 0
      %254 = vperm.xlu0 %253, %v220
      %v255 = vpop.permute.xlu0 %254
      %258 = vset.pattern.permute.xlu0 0
      %259 = vperm.xlu0 %258, %v221
      %v260 = vpop.permute.xlu0 %259
      %263 = vset.pattern.permute.xlu0 0
      %264 = vperm.xlu0 %263, %v222
      %v265 = vpop.permute.xlu0 %264
      %268 = vset.pattern.permute.xlu0 0
      %269 = vperm.xlu0 %268, %v223
      %v270 = vpop.permute.xlu0 %269
      %273 = vset.pattern.permute.xlu0 0
      %274 = vperm.xlu0 %273, %v224
      %v275 = vpop.permute.xlu0 %274
      %278 = vset.pattern.permute.xlu0 0
      %279 = vperm.xlu0 %278, %v225
      %v280 = vpop.permute.xlu0 %279
      %283 = vset.pattern.permute.xlu0 0
      %284 = vperm.xlu0 %283, %v226
      %v285 = vpop.permute.xlu0 %284
      %288 = vset.pattern.permute.xlu0 0
      %289 = vperm.xlu0 %288, %v227
      %v290 = vpop.permute.xlu0 %289
      %293 = vset.pattern.permute.xlu0 0
      %294 = vperm.xlu0 %293, %v228
      %v295 = vpop.permute.xlu0 %294
      %298 = vset.pattern.permute.xlu0 0
      %299 = vperm.xlu0 %298, %v229
      %v300 = vpop.permute.xlu0 %299
      %303 = vset.pattern.permute.xlu0 0
      %304 = vperm.xlu0 %303, %v230
      %v305 = vpop.permute.xlu0 %304
      %308 = vset.pattern.permute.xlu0 0
      %309 = vperm.xlu0 %308, %v231
      %v310 = vpop.permute.xlu0 %309
      %v312 = vld [vmem:[%s189] sm:$0x1]
      %v313 = vmul.f32 %v312, 0.5
      %v314 = vlaneseq
      %v315 = vshrl.u32 %v314, 7
      %v316 = vsub.s32 0, %v315
      %v317 = vrot.slane %v313, %v316
      %v318 = vsub.f32 %v317, %v235
      %v319 = vsub.f32 %v317, %v240
      %v320 = vsub.f32 %v317, %v245
      %v321 = vsub.f32 %v317, %v250
      %v322 = vsub.f32 %v317, %v255
      %v323 = vsub.f32 %v317, %v260
      %v324 = vsub.f32 %v317, %v265
      %v325 = vsub.f32 %v317, %v270
      %v326 = vsub.f32 %v317, %v275
      %v327 = vsub.f32 %v317, %v280
      %v328 = vsub.f32 %v317, %v285
      %v329 = vsub.f32 %v317, %v290
      %v330 = vsub.f32 %v317, %v295
      %v331 = vsub.f32 %v317, %v300
      %v332 = vsub.f32 %v317, %v305
      %v333 = vsub.f32 %v317, %v310
      %v334 = vtanh.pop %v318
      %v335 = vtanh.pop %v319
      %v336 = vtanh.pop %v320
      %v337 = vtanh.pop %v321
      %v338 = vtanh.pop %v322
      %v339 = vtanh.pop %v323
      %v340 = vtanh.pop %v324
      %v341 = vtanh.pop %v325
      %v342 = vtanh.pop %v326
      %v343 = vtanh.pop %v327
      %v344 = vtanh.pop %v328
      %v345 = vtanh.pop %v329
      %v346 = vtanh.pop %v330
      %v347 = vtanh.pop %v331
      %v348 = vtanh.pop %v332
      %v349 = vtanh.pop %v333
      %v350 = vadd.f32 %v334, 0.0
      %v351 = vadd.f32 %v335, 0.0
      %v352 = vadd.f32 %v336, 0.0
      %v353 = vadd.f32 %v337, 0.0
      %v354 = vadd.f32 %v338, 0.0
      %v355 = vadd.f32 %v339, 0.0
      %v356 = vadd.f32 %v340, 0.0
      %v357 = vadd.f32 %v341, 0.0
      %v358 = vadd.f32 %v342, 0.0
      %v359 = vadd.f32 %v343, 0.0
      %v360 = vadd.f32 %v344, 0.0
      %v361 = vadd.f32 %v345, 0.0
      %v362 = vadd.f32 %v346, 0.0
      %v363 = vadd.f32 %v347, 0.0
      %v364 = vadd.f32 %v348, 0.0
      %v365 = vadd.f32 %v349, 0.0
      %v366 = vld [vmem:[%s189 + $0x1] sm:$0x1]
      %v367 = vmul.f32 %v366, 0.5
      %v368 = vlaneseq
      %v369 = vshrl.u32 %v368, 7
      %v370 = vsub.s32 0, %v369
      %v371 = vrot.slane %v367, %v370
      %v372 = vsub.f32 %v371, %v235
      %v373 = vsub.f32 %v371, %v240
      %v374 = vsub.f32 %v371, %v245
      %v375 = vsub.f32 %v371, %v250
      %v376 = vsub.f32 %v371, %v255
      %v377 = vsub.f32 %v371, %v260
      %v378 = vsub.f32 %v371, %v265
      %v379 = vsub.f32 %v371, %v270
      %v380 = vsub.f32 %v371, %v275
      %v381 = vsub.f32 %v371, %v280
      %v382 = vsub.f32 %v371, %v285
      %v383 = vsub.f32 %v371, %v290
      %v384 = vsub.f32 %v371, %v295
      %v385 = vsub.f32 %v371, %v300
      %v386 = vsub.f32 %v371, %v305
      %v387 = vsub.f32 %v371, %v310
      %v388 = vtanh.pop %v372
      %v389 = vtanh.pop %v373
      %v390 = vtanh.pop %v374
      %v391 = vtanh.pop %v375
      %v392 = vtanh.pop %v376
      %v393 = vtanh.pop %v377
      %v394 = vtanh.pop %v378
      %v395 = vtanh.pop %v379
      %v396 = vtanh.pop %v380
      %v397 = vtanh.pop %v381
      %v398 = vtanh.pop %v382
      %v399 = vtanh.pop %v383
      %v400 = vtanh.pop %v384
      %v401 = vtanh.pop %v385
      %v402 = vtanh.pop %v386
      %v403 = vtanh.pop %v387
      %v404 = vadd.f32 %v350, %v388
      %v405 = vadd.f32 %v351, %v389
      %v406 = vadd.f32 %v352, %v390
      %v407 = vadd.f32 %v353, %v391
      %v408 = vadd.f32 %v354, %v392
      %v409 = vadd.f32 %v355, %v393
      %v410 = vadd.f32 %v356, %v394
      %v411 = vadd.f32 %v357, %v395
      %v412 = vadd.f32 %v358, %v396
      %v413 = vadd.f32 %v359, %v397
      %v414 = vadd.f32 %v360, %v398
      %v415 = vadd.f32 %v361, %v399
      %v416 = vadd.f32 %v362, %v400
      %v417 = vadd.f32 %v363, %v401
      %v418 = vadd.f32 %v364, %v402
      %v419 = vadd.f32 %v365, %v403
      %420 = vadd.xlane.f32.xlu0 %v404
      %v421 = vpop.xlane.xlu0 %420
      %422 = vadd.xlane.f32.xlu0 %v405
      %v423 = vpop.xlane.xlu0 %422
      %424 = vadd.xlane.f32.xlu0 %v406
      %v425 = vpop.xlane.xlu0 %424
      %426 = vadd.xlane.f32.xlu0 %v407
      %v427 = vpop.xlane.xlu0 %426
      %428 = vadd.xlane.f32.xlu0 %v408
      %v429 = vpop.xlane.xlu0 %428
      %430 = vadd.xlane.f32.xlu0 %v409
      %v431 = vpop.xlane.xlu0 %430
      %432 = vadd.xlane.f32.xlu0 %v410
      %v433 = vpop.xlane.xlu0 %432
      %434 = vadd.xlane.f32.xlu0 %v411
      %v435 = vpop.xlane.xlu0 %434
      %436 = vadd.xlane.f32.xlu0 %v412
      %v437 = vpop.xlane.xlu0 %436
      %438 = vadd.xlane.f32.xlu0 %v413
      %v439 = vpop.xlane.xlu0 %438
      %440 = vadd.xlane.f32.xlu0 %v414
      %v441 = vpop.xlane.xlu0 %440
      %442 = vadd.xlane.f32.xlu0 %v415
      %v443 = vpop.xlane.xlu0 %442
      %444 = vadd.xlane.f32.xlu0 %v416
      %v445 = vpop.xlane.xlu0 %444
      %446 = vadd.xlane.f32.xlu0 %v417
      %v447 = vpop.xlane.xlu0 %446
      %448 = vadd.xlane.f32.xlu0 %v418
      %v449 = vpop.xlane.xlu0 %448
      %450 = vadd.xlane.f32.xlu0 %v419
      %v451 = vpop.xlane.xlu0 %450
      %v452 = vmul.f32 %v421, 0.5
      %v453 = vmul.f32 %v423, 0.5
      %v454 = vmul.f32 %v425, 0.5
      %v455 = vmul.f32 %v427, 0.5
      %v456 = vmul.f32 %v429, 0.5
      %v457 = vmul.f32 %v431, 0.5
      %v458 = vmul.f32 %v433, 0.5
      %v459 = vmul.f32 %v435, 0.5
      %v460 = vmul.f32 %v437, 0.5
      %v461 = vmul.f32 %v439, 0.5
      %v462 = vmul.f32 %v441, 0.5
      %v463 = vmul.f32 %v443, 0.5
      %v464 = vmul.f32 %v445, 0.5
      %v465 = vmul.f32 %v447, 0.5
      %v466 = vmul.f32 %v449, 0.5
      %v467 = vmul.f32 %v451, 0.5
      %v468 = vadd.f32 %v452, 128.5
      %v469 = vadd.f32 %v453, 128.5
      %v470 = vadd.f32 %v454, 128.5
      %v471 = vadd.f32 %v455, 128.5
      %v472 = vadd.f32 %v456, 128.5
      %v473 = vadd.f32 %v457, 128.5
      %v474 = vadd.f32 %v458, 128.5
      %v475 = vadd.f32 %v459, 128.5
      %v476 = vadd.f32 %v460, 128.5
      %v477 = vadd.f32 %v461, 128.5
      %v478 = vadd.f32 %v462, 128.5
      %v479 = vadd.f32 %v463, 128.5
      %v480 = vadd.f32 %v464, 128.5
      %v481 = vadd.f32 %v465, 128.5
      %v482 = vadd.f32 %v466, 128.5
      %v483 = vadd.f32 %v467, 128.5
      %vm484 = vcmask 7168
      %485 = vst.msk [vmem:[%s198] sm:$0xff] %vm484, %v468
      %486 = vst.msk [vmem:[%s198 + $0x8] sm:$0xff] %vm484, %v469
      %487 = vst.msk [vmem:[%s198 + $0x10] sm:$0xff] %vm484, %v470
      %488 = vst.msk [vmem:[%s198 + $0x18] sm:$0xff] %vm484, %v471
      %489 = vst.msk [vmem:[%s198 + $0x20] sm:$0xff] %vm484, %v472
      %490 = vst.msk [vmem:[%s198 + $0x28] sm:$0xff] %vm484, %v473
      %491 = vst.msk [vmem:[%s198 + $0x30] sm:$0xff] %vm484, %v474
      %492 = vst.msk [vmem:[%s198 + $0x38] sm:$0xff] %vm484, %v475
      %493 = vst.msk [vmem:[%s198 + $0x40] sm:$0xff] %vm484, %v476
      %494 = vst.msk [vmem:[%s198 + $0x48] sm:$0xff] %vm484, %v477
      %495 = vst.msk [vmem:[%s198 + $0x50] sm:$0xff] %vm484, %v478
      %496 = vst.msk [vmem:[%s198 + $0x58] sm:$0xff] %vm484, %v479
      %497 = vst.msk [vmem:[%s198 + $0x60] sm:$0xff] %vm484, %v480
      %498 = vst.msk [vmem:[%s198 + $0x68] sm:$0xff] %vm484, %v481
      %499 = vst.msk [vmem:[%s198 + $0x70] sm:$0xff] %vm484, %v482
      %500 = vst.msk [vmem:[%s198 + $0x78] sm:$0xff] %vm484, %v483
      %s501 = smul.u32 16, %s18
      %p502 = scmp.lt.s32.totalorder %s17, 1
      %s503 = scalar_select %p502, %s17, 1
      %p504 = scmp.lt.s32.totalorder %s501, 31
      %s505 = scalar_select %p504, %s501, 31
      %s506 = smul.addr %s503, 32
      %s507 = sadd.s32 %s505, %s506
      %s508 = smul.addr %s507, 8
      %s509 = scalar_lea.vmem %s2, %s508
      // Predicated region
      $region29: #{_smooth_rank_impl.1} parent=27 // pred_check
        %p510 = pneg %p99
      $region30: #{_smooth_rank_impl.1} parent=27 // pred_check_branch
        %512 = sbr.rel (%p510) target = $region32
      $region31: #{_smooth_rank_impl.1} parent=27 // pred_region
        %s513 = smul.u32 16, %s18
      $region32: #{_smooth_rank_impl.1} parent=27 // pred_fallthru
        _
    $region28: #{_smooth_rank_impl.1} parent=5 // pred_fallthru
      _
    %p514 = scmp.le.s32.totalorder 2, %s8
    // Predicated region
    $region33: #{_smooth_rank_impl.1} parent=5 // pred_check
      %p515 = pneg %p514
    $region34: #{_smooth_rank_impl.1} parent=5 // pred_check_branch
      %517 = sbr.rel (%p515) target = $region36
    $region35: #{_smooth_rank_impl.1} parent=5 // pred_region
      %s518 = ssub.s32 %s8, 2
      // Predicated region
      $region37: #{_smooth_rank_impl.1} parent=35 // pred_check
        %p519 = pneg %p105
      $region38: #{_smooth_rank_impl.1} parent=35 // pred_check_branch
        %521 = sbr.rel (%p519) target = $region40
      $region39: #{_smooth_rank_impl.1} parent=35 // pred_region
        %s522 = smul.u32 16, %s20
        %p523 = scmp.lt.s32.totalorder %s19, 1
        %s524 = scalar_select %p523, %s19, 1
        %p525 = scmp.lt.s32.totalorder %s522, 31
        %s526 = scalar_select %p525, %s522, 31
        %s527 = smul.addr %s524, 32
        %s528 = sadd.s32 %s526, %s527
        %s529 = smul.addr %s528, 8
        %s530 = scalar_lea.vmem %s2, %s529
      $region40: #{_smooth_rank_impl.1} parent=35 // pred_fallthru
        _
    $region36: #{_smooth_rank_impl.1} parent=5 // pred_fallthru
      _
  $region6: #{_smooth_rank_impl.1} parent=0 // loop_footer
    %s12 = sadd.s32 1, %s8
  $region7: #{_smooth_rank_impl.1} parent=0 // loop_footer_branch
    %7 = sbr.rel target = $region3
  $region8: #{_smooth_rank_impl.1} parent=0 // loop_exit
    _

</llo_original>
